<compile_context>
chip_gen: v7x
topology: tpu7x:2x2x1
jax: 0.10.0
libtpu: 0.0.40
codegen_flags: <defaults>
</compile_context>

<pallas_src>
import functools

import jax
import jax.numpy as jnp
from jax.experimental import pallas as pl
from jax.experimental.pallas import tpu as pltpu


def _lorentzian_kernel(uv_ref, out_ref, *, alpha, beta, training):
    # uv_ref: (2, dim, TILE_E) f32 slab -- edges on lanes, features on sublanes.
    u = uv_ref[0]                                   # (dim, TILE_E)
    v = uv_ref[1]                                   # (dim, TILE_E)

    nu = jnp.sum(u * u, axis=0, keepdims=True)      # ||u||^2      -> (1, TILE_E)
    nv = jnp.sum(v * v, axis=0, keepdims=True)      # ||v||^2
    uv = jnp.sum(u * v, axis=0, keepdims=True)      # <u, v> (euclidean part)

    # hyperboloid lift: a_0 = sqrt(||u||^2 + beta); spatial coords unchanged (EUP sqrt).
    a0 = jnp.sqrt(nu + beta)
    b0 = jnp.sqrt(nv + beta)

    # Lorentzian inner product: -a_0 b_0 + sum_i u_i v_i
    inner = -a0 * b0 + uv
    # squared Lorentzian distance: -2 beta - 2 <a, b>_L
    dist = -2.0 * beta - 2.0 * inner

    if training:
        out_ref[...] = dist + 1e-05
    else:
        out_ref[...] = -(1.0 + alpha * (nu - nv)) * dist


@functools.partial(jax.jit, static_argnames=("alpha", "beta", "training", "tile_e"))
def lorentzian_score(embeddings, idxs, *, alpha=5.0, beta=1.0, training=True,
                     tile_e=1024):
    """Pallas implementation of Lorentzian.forward.

    embeddings: (num_entity, dim) f32 table
    idxs:       (..., 2) int32 edge indices
    returns:    (...,) f32 scores
    """
    num_entity, dim = embeddings.shape
    lead_shape = idxs.shape[:-1]
    idxs_flat = idxs.reshape(-1, 2).astype(jnp.int32)
    n_edges = idxs_flat.shape[0]

    # Clamp the edge tile so the double-buffered input slab
    # (2 endpoints x 2 pipeline buffers x dim x tile_e x 4B) stays <= ~8 MiB of VMEM.
    budget = 8 * 1024 * 1024
    max_tile = max(128, (budget // (16 * dim)) // 128 * 128)
    # Don't over-pad tiny edge batches: smallest lane-aligned tile covering the edges.
    cover = max(128, pl.cdiv(max(n_edges, 1), 128) * 128)
    tile_e = max(128, min(tile_e, max_tile, cover))

    n_pad = pl.cdiv(max(n_edges, 1), tile_e) * tile_e
    pad = n_pad - n_edges

    idx_u = jnp.pad(idxs_flat[:, 0], (0, pad))
    idx_v = jnp.pad(idxs_flat[:, 1], (0, pad))
    idx_cat = jnp.concatenate([idx_u, idx_v])                      # (2*n_pad,)

    # Wrapper-side gather (one fused row-gather) + one batched transpose so the edge
    # axis lands on the lane axis inside the kernel.
    # TODO(synk): the dynamic row gather itself stays in XLA; Pallas has no efficient
    # general in-kernel gather for tables that exceed VMEM.
    g = jnp.take(embeddings.astype(jnp.float32), idx_cat, axis=0)  # (2*n_pad, dim)
    uv_t = jnp.transpose(g.reshape(2, n_pad, dim), (0, 2, 1))      # (2, dim, n_pad)

    kernel = functools.partial(
        _lorentzian_kernel,
        alpha=float(alpha),
        beta=float(beta),
        training=bool(training),
    )

    out = pl.pallas_call(
        kernel,
        grid=(n_pad // tile_e,),
        in_specs=[pl.BlockSpec((2, dim, tile_e), lambda i: (0, 0, i))],
        out_specs=pl.BlockSpec((1, tile_e), lambda i: (0, i)),
        out_shape=jax.ShapeDtypeStruct((1, n_pad), jnp.float32),
        compiler_params=pltpu.CompilerParams(
            dimension_semantics=("parallel",),
        ),
    )(uv_t)

    return out[0, :n_edges].reshape(lead_shape)


def _reference_score(embeddings, idxs, *, alpha=5.0, beta=1.0, training=True):
    """Pure-JAX reference mirroring the PyTorch module."""
    e = embeddings[idxs]                                   # (..., 2, dim)
    a0 = jnp.sqrt(jnp.sum(e * e, axis=-1, keepdims=True) + beta)
    h = jnp.concatenate((a0, e), axis=-1)                  # (..., 2, dim+1)
    a, b = h[..., 0, :], h[..., 1, :]
    prod = a * b
    prod = prod.at[..., 0].multiply(-1.0)
    inner = jnp.sum(prod, axis=-1)
    dist = -2.0 * beta - 2.0 * inner
    if training:
        return dist + 1e-05
    eun = jnp.sum(e * e, axis=-1)                          # (..., 2)
    return -(1.0 + alpha * (eun[..., 0] - eun[..., 1])) * dist


if __name__ == "__main__":
    key = jax.random.PRNGKey(0)
    k_emb, k_idx = jax.random.split(key)

    num_entity, dim = 64, 32
    alpha, beta = 5.0, 1.0

    # deterministic "checkpoint": nn.Embedding default init ~ N(0, 1)
    embeddings = jax.random.normal(k_emb, (num_entity, dim), dtype=jnp.float32)
    idxs = jax.random.randint(k_idx, (2, 4, 2), 0, num_entity, dtype=jnp.int32)

    ok = True
    for training in (True, False):
        got = jax.block_until_ready(
            lorentzian_score(embeddings, idxs, alpha=alpha, beta=beta,
                             training=training)
        )
        want = _reference_score(embeddings, idxs, alpha=alpha, beta=beta,
                                training=training)
        ok = ok and bool(jnp.allclose(got, want, rtol=1e-5, atol=1e-5))

    if ok:
        print("KERNEL_OK")
    else:
        raise SystemExit("mismatch vs reference")
</pallas_src>

<mosaic_0001>
module attributes {stable_mosaic.version = 11 : i64} {
  func.func @_lorentzian_kernel(%arg0: i32, %arg1: memref<2x32x128xf32, #tpu.memory_space<vmem>>, %arg2: memref<1x128xf32, #tpu.memory_space<vmem>>) attributes {dimension_semantics = [#tpu.dimension_semantics<parallel>], iteration_bounds = array<i64: 1>, scalar_prefetch = 0 : i64, scratch_operands = 0 : i64, tpu.core_type = #tpu.core_type<tc>, window_params = [{transform_indices = @transform_0, window_bounds = array<i64: 2, 32, 128>}, {transform_indices = @transform_1, window_bounds = array<i64: 1, 128>}]} {
    %c0 = arith.constant 0 : index
    %c0_0 = arith.constant 0 : index
    %c0_1 = arith.constant 0 : index
    %0 = vector.load %arg1[%c0, %c0_0, %c0_1] : memref<2x32x128xf32, #tpu.memory_space<vmem>>, vector<1x32x128xf32>
    %1 = vector.shape_cast %0 : vector<1x32x128xf32> to vector<32x128xf32>
    %c1 = arith.constant 1 : index
    %c0_2 = arith.constant 0 : index
    %c0_3 = arith.constant 0 : index
    %2 = vector.load %arg1[%c1, %c0_2, %c0_3] : memref<2x32x128xf32, #tpu.memory_space<vmem>>, vector<1x32x128xf32>
    %3 = vector.shape_cast %2 : vector<1x32x128xf32> to vector<32x128xf32>
    %4 = arith.mulf %1, %1 : vector<32x128xf32>
    %cst = arith.constant dense<0.000000e+00> : vector<128xf32>
    %5 = vector.multi_reduction <add>, %4, %cst [0] : vector<32x128xf32> to vector<128xf32>
    %6 = vector.shape_cast %5 : vector<128xf32> to vector<1x128xf32>
    %7 = arith.mulf %3, %3 : vector<32x128xf32>
    %cst_4 = arith.constant dense<0.000000e+00> : vector<128xf32>
    %8 = vector.multi_reduction <add>, %7, %cst_4 [0] : vector<32x128xf32> to vector<128xf32>
    %9 = vector.shape_cast %8 : vector<128xf32> to vector<1x128xf32>
    %10 = arith.mulf %1, %3 : vector<32x128xf32>
    %cst_5 = arith.constant dense<0.000000e+00> : vector<128xf32>
    %11 = vector.multi_reduction <add>, %10, %cst_5 [0] : vector<32x128xf32> to vector<128xf32>
    %12 = vector.shape_cast %11 : vector<128xf32> to vector<1x128xf32>
    %cst_6 = arith.constant 1.000000e+00 : f32
    %13 = vector.broadcast %cst_6 : f32 to vector<1x128xf32>
    %14 = arith.addf %6, %13 : vector<1x128xf32>
    %15 = math.sqrt %14 : vector<1x128xf32>
    %cst_7 = arith.constant 1.000000e+00 : f32
    %16 = vector.broadcast %cst_7 : f32 to vector<1x128xf32>
    %17 = arith.addf %9, %16 : vector<1x128xf32>
    %18 = math.sqrt %17 : vector<1x128xf32>
    %cst_8 = arith.constant 0.000000e+00 : f32
    %19 = vector.broadcast %cst_8 : f32 to vector<1x128xf32>
    %20 = arith.subf %19, %15 : vector<1x128xf32>
    %21 = arith.mulf %20, %18 : vector<1x128xf32>
    %22 = arith.addf %21, %12 : vector<1x128xf32>
    %cst_9 = arith.constant 2.000000e+00 : f32
    %23 = vector.broadcast %cst_9 : f32 to vector<1x128xf32>
    %24 = arith.mulf %23, %22 : vector<1x128xf32>
    %cst_10 = arith.constant -2.000000e+00 : f32
    %25 = vector.broadcast %cst_10 : f32 to vector<1x128xf32>
    %26 = arith.subf %25, %24 : vector<1x128xf32>
    %cst_11 = arith.constant 9.99999974E-6 : f32
    %27 = vector.broadcast %cst_11 : f32 to vector<1x128xf32>
    %28 = arith.addf %26, %27 : vector<1x128xf32>
    %c0_12 = arith.constant 0 : index
    %c0_13 = arith.constant 0 : index
    %29 = vector.load %arg2[%c0_12, %c0_13] : memref<1x128xf32, #tpu.memory_space<vmem>>, vector<1x128xf32>
    tpu.vector_store %arg2[%c0_12, %c0_13], %28 {strides = array<i32>} : memref<1x128xf32, #tpu.memory_space<vmem>>, vector<1x128xf32>,
    return
  }
  func.func @transform_0(%arg0: i32) -> (i32, i32, i32) {
    %c0_i32 = arith.constant 0 : i32
    %c0_i32_0 = arith.constant 0 : i32
    %c0_i32_1 = arith.constant 0 : i32
    return %c0_i32, %c0_i32_0, %arg0 : i32, i32, i32
  }
  func.func @transform_1(%arg0: i32) -> (i32, i32) {
    %c0_i32 = arith.constant 0 : i32
    %c0_i32_0 = arith.constant 0 : i32
    return %c0_i32, %arg0 : i32, i32
  }
}

</mosaic_0001>

<llo_original>
// kernel: squeeze.5
$region0: #{squeeze.5}
  %s0 = inlined_call_operand.vmem [shape: f32[8], index: 0, kind: input, shape index: {}]
  %s1 = inlined_call_operand.hbm [shape: f32[2,4], index: 1, kind: output, shape index: {}]
  $region1: #{squeeze.5} parent=0
    #allocation0 [shape = 'u8[1024]{0}', space=vmem, size = 0x400, scoped, tag = 'operand span for operand 1']
    #allocation1 [shape = 's32[1]{0}', space=sflag, size = 0x4, scoped, tag = 'scoped memory for squeeze.5']
    #allocation2 [shape = 'u8[4096]{0}', space=vmem, size = 0x1000, scoped, tag = 'scoped mem for output reshape']
    #allocation3 [shape = 'u8[4096]{0}', space=vmem, size = 0x1000, scoped, tag = 'scoped mem for input reshape']
    %2 = vsyncpa [#allocation1], 0
    %s4 = sshllo.u32 0, 1
    %v5 = vld [vmem:[%s0] sm:%s4]
    %6 = vst [vmem:[#allocation3] sm:%s4] %v5
    %v7 = vld [vmem:[#allocation3] sm:$0x1]
    %vm8 = vcmask 31744
    %9 = vst.msk [vmem:[#allocation2] sm:$0x1] %vm8, %v7
    %v10 = vld [vmem:[#allocation3] sm:$0x1]
    %11 = vrot.lane.b32.xlu0 %v10, 124
    %v12 = vpop.permute.xlu0 %11
    %vm13 = vcmask 31744
    %s14 = scalar_lea.vmem [#allocation2], 1
    %15 = vst.msk [vmem:[%s14] sm:$0x1] %vm13, %v12
    %s17 = sshllo.u32 0, 2
    %v19 = vld [vmem:[#allocation2] sm:%s17]
    %s20 = sshllo.u32 0, 2
    %21 = vst [vmem:[#allocation0] sm:%s20] %v19
    %s23 = ssub.s32 32, 32
    %24 = vsyncadd [#allocation1], %s23
    %s26 = sshll.u32 [#allocation0], 4
    %s27 = int_to_ptr.vmem [resolvable:$true] %s26
    %29 = dma.vmem_to_hbm [thread:$0]  %s27, 32, %s1, [#allocation1]
    %30 = dma.done [#allocation1], 32
    %31 = vsyncpa [#allocation1], 1

// kernel: lorentzian_score.1
$region0: #{lorentzian_score.1}
  #allocation0 [shape = 'u32[]', space=smem, size = 0x4, offset = 0x4, fixed_abs, tag = 'smem constant byte address 0x4 - core index']
  #allocation1 [shape = 'u32[144,128]{1,0:T(1,128)}', space=vmem, size = 0x12000, scoped, tag = 'internal scratch']
  %s0 = inlined_call_operand.vmem [shape: f32[2,32,128], index: 0, kind: input, shape index: {}]
  %s1 = inlined_call_operand.vmem [shape: f32[1,128], index: 1, kind: output, shape index: {}]
  %s2 = sld [smem:[#allocation0]]
  $region14: #{lorentzian_score.1} parent=0
    _
  %s4 = ssub.s32 1, %s2
  %s5 = scalar_select 0, %s4, %s2
  // Predicated region
  $region2: #{lorentzian_score.1} parent=0 // pred_check
    _
  $region3: #{lorentzian_score.1} parent=0 // pred_check_branch
    %7 = sbr.rel (0) target = $region5
  $region4: #{lorentzian_score.1} parent=0 // pred_region
    _
  $region5: #{lorentzian_score.1} parent=0 // pred_fallthru
    _
  %v8 = vld [vmem:[%s0] sm:$0xff]
  %v9 = vld [vmem:[%s0 + $0x8] sm:$0xff]
  %v10 = vld [vmem:[%s0 + $0x10] sm:$0xff]
  %v11 = vld [vmem:[%s0 + $0x18] sm:$0xff]
  %s12 = scalar_lea.vmem %s0, 32
  %v13 = vld [vmem:[%s12] sm:$0xff]
  %v14 = vld [vmem:[%s12 + $0x8] sm:$0xff]
  %v15 = vld [vmem:[%s12 + $0x10] sm:$0xff]
  %v16 = vld [vmem:[%s12 + $0x18] sm:$0xff]
  %v17 = vmul.f32 %v8, %v8
  %v18 = vmul.f32 %v9, %v9
  %v19 = vmul.f32 %v10, %v10
  %v20 = vmul.f32 %v11, %v11
  %v21 = vadd.f32 %v17, %v18
  %v22 = vadd.f32 %v21, %v19
  %v23 = vadd.f32 %v22, %v20
  %v24 = vrot.slane %v23, 4
  %v25 = vadd.f32 %v23, %v24
  %v26 = vrot.slane %v25, 2
  %v27 = vadd.f32 %v25, %v26
  %v28 = vrot.slane %v27, 1
  %v29 = vadd.f32 %v27, %v28
  %v30 = vmul.f32 %v13, %v13
  %v31 = vmul.f32 %v14, %v14
  %v32 = vmul.f32 %v15, %v15
  %v33 = vmul.f32 %v16, %v16
  %v34 = vadd.f32 %v30, %v31
  %v35 = vadd.f32 %v34, %v32
  %v36 = vadd.f32 %v35, %v33
  %v37 = vrot.slane %v36, 4
  %v38 = vadd.f32 %v36, %v37
  %v39 = vrot.slane %v38, 2
  %v40 = vadd.f32 %v38, %v39
  %v41 = vrot.slane %v40, 1
  %v42 = vadd.f32 %v40, %v41
  %v43 = vmul.f32 %v8, %v13
  %v44 = vmul.f32 %v9, %v14
  %v45 = vmul.f32 %v10, %v15
  %v46 = vmul.f32 %v11, %v16
  %v47 = vadd.f32 %v43, %v44
  %v48 = vadd.f32 %v47, %v45
  %v49 = vadd.f32 %v48, %v46
  %v50 = vrot.slane %v49, 4
  %v51 = vadd.f32 %v49, %v50
  %v52 = vrot.slane %v51, 2
  %v53 = vadd.f32 %v51, %v52
  %v54 = vrot.slane %v53, 1
  %v55 = vadd.f32 %v53, %v54
  %v56 = vadd.f32 %v29, 1.0
  %v57 = vrsqrt.pop %v56
  %v58 = vmul.f32 %v56, %v57
  %vm59 = vcmp.eq.f32.partialorder %v56, inf
  %v60 = vsel %vm59, %v56, %v58
  %vm61 = vcmp.eq.f32.partialorder %v56, 0.0
  %v62 = vand.u32 %v56, 2147483648
  %v63 = vsel %vm61, %v62, %v60
  %v64 = vadd.f32 %v42, 1.0
  %v65 = vrsqrt.pop %v64
  %v66 = vmul.f32 %v64, %v65
  %vm67 = vcmp.eq.f32.partialorder %v64, inf
  %v68 = vsel %vm67, %v64, %v66
  %vm69 = vcmp.eq.f32.partialorder %v64, 0.0
  %v70 = vand.u32 %v64, 2147483648
  %v71 = vsel %vm69, %v70, %v68
  %v72 = vsub.f32 0.0, %v63
  %v73 = vmul.f32 %v72, %v71
  %v74 = vadd.f32 %v73, %v55
  %v75 = vmul.f32 %v74, 2.0
  %v76 = vsub.f32 -2.0, %v75
  %v77 = vadd.f32 %v76, 1e-05
  %78 = vst [vmem:[%s1] sm:$0x1] %v77
  // Predicated region
  $region6: #{lorentzian_score.1} parent=0 // pred_check
    _
  $region7: #{lorentzian_score.1} parent=0 // pred_check_branch
    %80 = sbr.rel (0) target = $region9
  $region8: #{lorentzian_score.1} parent=0 // pred_region
    _
  $region9: #{lorentzian_score.1} parent=0 // pred_fallthru
    _
  // Predicated region
  $region10: #{lorentzian_score.1} parent=0 // pred_check
    _
  $region11: #{lorentzian_score.1} parent=0 // pred_check_branch
    %82 = sbr.rel (0) target = $region13
  $region12: #{lorentzian_score.1} parent=0 // pred_region
    _
  $region13: #{lorentzian_score.1} parent=0 // pred_fallthru
    _

</llo_original>
